<compile_context>
chip_gen: v7x
topology: tpu7x:2x2x1
jax: 0.10.0
libtpu: 0.0.40
codegen_flags: <defaults>
</compile_context>

<pallas_src>
import functools

import jax
import jax.numpy as jnp
from jax.experimental import pallas as pl
from jax.experimental.pallas import tpu as pltpu


def _round_up(x, m):
    return ((x + m - 1) // m) * m


def _vmem_capacity_bytes():
    try:
        return int(pltpu.get_tpu_info().vmem_capacity_bytes)
    except Exception:
        return 64 * 1024 * 1024          # conservative (v7x per-core)


def query_encoder_kernel(x_ref, w_ref, b_ref, o_ref, acc_ref, *, inv_n):
    # x_ref:   (TB, TN, K)   descriptor slab for TB queries
    # w_ref:   (K, ND)       Linear weight (pre-transposed, lane-padded)
    # b_ref:   (1, ND)       bias (lane-padded)
    # o_ref:   (TB, ND)      L2-normalized mean queries
    # acc_ref: (TB, K) f32   running descriptor sum (VMEM scratch)
    k = pl.program_id(1)

    @pl.when(k == 0)
    def _():
        acc_ref[...] = jnp.zeros_like(acc_ref)

    x = x_ref[...]
    if x.dtype != jnp.float32:
        x = x.astype(jnp.float32)        # accumulate in f32 even if D streams bf16
    acc_ref[...] += jnp.sum(x, axis=1)

    @pl.when(k == pl.num_programs(1) - 1)
    def _():
        m = jnp.dot(acc_ref[...], w_ref[...],
                    preferred_element_type=jnp.float32) * inv_n + b_ref[...]
        ss = jnp.sum(m * m, axis=1, keepdims=True)
        # No epsilon: matches the PyTorch module (NaN if the mean query is 0).
        o_ref[...] = (m * jax.lax.rsqrt(ss)).astype(o_ref.dtype)


def query_encoder(D, weight, bias, *, tb=None, tn=None, stream_bf16=False):
    """D: [B, N, 512]; weight: [n_dims, 512] (torch layout); bias: [n_dims]."""
    B, N, K = D.shape
    n_dims = weight.shape[0]
    assert weight.shape == (n_dims, K) and bias.shape == (n_dims,)

    # ---- parameter glue (plain JAX): transpose, lane-pad n_dims to 128. -----
    nd_p = _round_up(n_dims, 128)
    w_t = jnp.transpose(weight).astype(jnp.float32)          # (K, n_dims)
    bias_f = bias.astype(jnp.float32)
    if nd_p != n_dims:
        w_t = jnp.pad(w_t, ((0, 0), (0, nd_p - n_dims)))
        bias_f = jnp.pad(bias_f, (0, nd_p - n_dims))
    b2d = bias_f.reshape(1, nd_p)

    if stream_bf16:
        # Optional ~2x HBM-bandwidth win on the streamed input; re-validated
        # below with a looser tolerance.
        D = D.astype(jnp.bfloat16)
    itemsize = jnp.dtype(D.dtype).itemsize

    # ---- batch tile TB (multiple of 8). -------------------------------------
    b8 = _round_up(B, 8)
    if tb is None:
        tb = min(b8, 256)
        if b8 >= 16:
            # v7x: keep >= 2 grid steps on the "parallel" batch axis so both
            # TensorCores get work.
            tb = min(tb, max(8, ((b8 // 2) // 8) * 8))
    else:
        tb = max(8, (tb // 8) * 8)
    tb = min(tb, b8)
    b_padded = _round_up(B, tb)
    num_b_tiles = b_padded // tb

    # ---- descriptor tile TN (multiple of 8), from generation-aware budget. --
    vmem_cap = _vmem_capacity_bytes()
    n8 = _round_up(N, 8)
    if tn is None:
        per_buf_cap = (12 << 20) if vmem_cap <= (64 << 20) else (16 << 20)
        fixed = (K * nd_p * 4 + 2 * nd_p * 4      # resident weight + bias
                 + 2 * tb * nd_p * 4              # output double buffer
                 + tb * K * 4                     # accumulator scratch
                 + (2 << 20))                     # slack
        budget = max(vmem_cap // 2, 32 << 20) - fixed
        per_buf = max(512 << 10, min(budget // 2, per_buf_cap))
        tn = per_buf // (tb * K * itemsize)
        tn = max(8, (tn // 8) * 8)
    else:
        tn = max(8, (tn // 8) * 8)
    tn = min(tn, n8)
    n_padded = _round_up(N, tn)
    num_n_tiles = n_padded // tn

    # ---- zero-pad (exact: padded rows/descriptors contribute 0 to the sum). -
    if (b_padded, n_padded) != (B, N):
        D = jnp.pad(D, ((0, b_padded - B), (0, n_padded - N), (0, 0)))

    used = (2 * tb * tn * K * itemsize            # input double buffer
            + K * nd_p * 4 + 2 * nd_p * 4         # weight / bias
            + 2 * tb * nd_p * 4                   # output double buffer
            + tb * K * 4)                         # accumulator
    vmem_limit = int(min(max(used + (4 << 20), 32 << 20), int(vmem_cap * 0.9)))

    grid_spec = pltpu.PrefetchScalarGridSpec(
        num_scalar_prefetch=0,
        grid=(num_b_tiles, num_n_tiles),          # reduction axis trailing
        in_specs=[
            pl.BlockSpec((tb, tn, K), lambda i, k: (i, k, 0)),
            # Grid-invariant weight / bias: constant index_map keeps the same
            # VMEM block resident across all grid steps.
            pl.BlockSpec((K, nd_p), lambda i, k: (0, 0)),
            pl.BlockSpec((1, nd_p), lambda i, k: (0, 0)),
        ],
        out_specs=pl.BlockSpec((tb, nd_p), lambda i, k: (i, 0)),
        scratch_shapes=[pltpu.VMEM((tb, K), jnp.float32)],
    )

    out = pl.pallas_call(
        functools.partial(query_encoder_kernel, inv_n=float(1.0 / N)),
        out_shape=jax.ShapeDtypeStruct((b_padded, nd_p), jnp.float32),
        grid_spec=grid_spec,
        compiler_params=pltpu.CompilerParams(
            dimension_semantics=("parallel", "arbitrary"),
            vmem_limit_bytes=vmem_limit,
        ),
    )(D, w_t, b2d)
    return out[:B, :n_dims]


def query_encoder_ref(D, weight, bias):
    """Pure-JAX reference matching the PyTorch forward (linear, then mean)."""
    y = jnp.einsum("bnk,dk->bnd", D.astype(jnp.float32), weight) + bias
    m = jnp.mean(y, axis=1)
    return m / jnp.linalg.norm(m, axis=1, keepdims=True)


if __name__ == "__main__":
    B, N, K = 2, 8, 512      # K=512 fixed by the module; small demo shapes
    n_dims = 128             # args.n_dims (lane-aligned)

    key = jax.random.PRNGKey(0)
    k_x, k_w, k_b = jax.random.split(key, 3)

    D = jax.random.normal(k_x, (B, N, K), dtype=jnp.float32)
    # Deterministic "Linear(512, n_dims)" parameters (torch layout: [out, in]).
    bound = 1.0 / (K ** 0.5)
    weight = jax.random.uniform(k_w, (n_dims, K), dtype=jnp.float32,
                                minval=-bound, maxval=bound)
    bias = jax.random.uniform(k_b, (n_dims,), dtype=jnp.float32,
                              minval=-bound, maxval=bound)

    out = jax.block_until_ready(query_encoder(D, weight, bias))
    ref = query_encoder_ref(D, weight, bias)
    assert out.shape == (B, n_dims)
    # Sum-before-matmul changes FP summation order vs the reference; results
    # agree to well under the tolerance below.
    assert jnp.allclose(out, ref, atol=2e-5, rtol=2e-5), "mismatch vs reference"

    # Tiled + padded path: B and N not multiples of the tiles -> exercises the
    # descriptor-axis accumulator (3 N-tiles) and batch padding (3 B-tiles).
    B2, N2 = 20, 20
    D2 = jax.random.normal(jax.random.PRNGKey(1), (B2, N2, K), dtype=jnp.float32)
    out2 = jax.block_until_ready(query_encoder(D2, weight, bias, tb=8, tn=8))
    ref2 = query_encoder_ref(D2, weight, bias)
    assert out2.shape == (B2, n_dims)
    assert jnp.allclose(out2, ref2, atol=2e-5, rtol=2e-5), "mismatch (tiled path)"

    # Non-multiple-of-128 n_dims -> lane-padded weight/bias/output, sliced back.
    n_dims3 = 100
    w3 = jax.random.uniform(jax.random.PRNGKey(2), (n_dims3, K),
                            dtype=jnp.float32, minval=-bound, maxval=bound)
    b3 = jax.random.uniform(jax.random.PRNGKey(3), (n_dims3,),
                            dtype=jnp.float32, minval=-bound, maxval=bound)
    out3 = jax.block_until_ready(query_encoder(D2, w3, b3, tb=8, tn=8))
    ref3 = query_encoder_ref(D2, w3, b3)
    assert out3.shape == (B2, n_dims3)
    assert jnp.allclose(out3, ref3, atol=2e-5, rtol=2e-5), "mismatch (nd-pad path)"

    # Optional bf16 streaming of D (biggest raw HBM-bandwidth lever); looser
    # tolerance because the input itself is rounded to bf16.
    out4 = jax.block_until_ready(query_encoder(D, weight, bias, stream_bf16=True))
    assert out4.shape == (B, n_dims)
    assert jnp.allclose(out4, ref, atol=2e-2, rtol=2e-2), "mismatch (bf16 stream)"

    print("KERNEL_OK")
</pallas_src>

<mosaic_0001>
module attributes {stable_mosaic.version = 11 : i64} {
  func.func @query_encoder_kernel(%arg0: i32, %arg1: i32, %arg2: memref<8x8x512xf32, #tpu.memory_space<vmem>>, %arg3: memref<512x128xf32, #tpu.memory_space<vmem>>, %arg4: memref<1x128xf32, #tpu.memory_space<vmem>>, %arg5: memref<8x128xf32, #tpu.memory_space<vmem>>, %arg6: memref<8x512xf32, #tpu.memory_space<vmem>>) attributes {dimension_semantics = [#tpu.dimension_semantics<parallel>, #tpu.dimension_semantics<arbitrary>], iteration_bounds = array<i64: 1, 1>, scalar_prefetch = 0 : i64, scratch_operands = 1 : i64, tpu.core_type = #tpu.core_type<tc>, window_params = [{transform_indices = @transform_0, window_bounds = array<i64: 8, 8, 512>}, {pipeline_mode = #tpu.pipeline_mode<synchronous>, transform_indices = @transform_1, window_bounds = array<i64: 512, 128>}, {pipeline_mode = #tpu.pipeline_mode<synchronous>, transform_indices = @transform_2, window_bounds = array<i64: 1, 128>}, {transform_indices = @transform_3, window_bounds = array<i64: 8, 128>}]} {
    %c0_i32 = arith.constant 0 : i32
    %0 = arith.cmpi eq, %arg1, %c0_i32 : i32
    %1 = arith.extui %0 : i1 to i32
    %c0_i32_0 = arith.constant 0 : i32
    %2 = arith.cmpi ne, %1, %c0_i32_0 : i32
    scf.if %2 {
      %cst_9 = arith.constant 0.000000e+00 : f32
      %11 = vector.broadcast %cst_9 : f32 to vector<8x512xf32>
      %c0_10 = arith.constant 0 : index
      %c0_11 = arith.constant 0 : index
      %12 = vector.load %arg6[%c0_10, %c0_11] : memref<8x512xf32, #tpu.memory_space<vmem>>, vector<8x512xf32>
      tpu.vector_store %arg6[%c0_10, %c0_11], %11 {strides = array<i32>} : memref<8x512xf32, #tpu.memory_space<vmem>>, vector<8x512xf32>,
    } else {
    }
    %c0 = arith.constant 0 : index
    %c0_1 = arith.constant 0 : index
    %c0_2 = arith.constant 0 : index
    %3 = vector.load %arg2[%c0, %c0_1, %c0_2] : memref<8x8x512xf32, #tpu.memory_space<vmem>>, vector<8x8x512xf32>
    %c0_3 = arith.constant 0 : index
    %c0_4 = arith.constant 0 : index
    %4 = vector.load %arg6[%c0_3, %c0_4] : memref<8x512xf32, #tpu.memory_space<vmem>>, vector<8x512xf32>
    %cst = arith.constant dense<0.000000e+00> : vector<8x512xf32>
    %5 = vector.multi_reduction <add>, %3, %cst [1] : vector<8x8x512xf32> to vector<8x512xf32>
    %6 = arith.addf %4, %5 : vector<8x512xf32>
    %c0_5 = arith.constant 0 : index
    %c0_6 = arith.constant 0 : index
    %7 = vector.load %arg6[%c0_5, %c0_6] : memref<8x512xf32, #tpu.memory_space<vmem>>, vector<8x512xf32>
    tpu.vector_store %arg6[%c0_5, %c0_6], %6 {strides = array<i32>} : memref<8x512xf32, #tpu.memory_space<vmem>>, vector<8x512xf32>,
    %c0_i32_7 = arith.constant 0 : i32
    %8 = arith.cmpi eq, %arg1, %c0_i32_7 : i32
    %9 = arith.extui %8 : i1 to i32
    %c0_i32_8 = arith.constant 0 : i32
    %10 = arith.cmpi ne, %9, %c0_i32_8 : i32
    scf.if %10 {
      %c0_9 = arith.constant 0 : index
      %c0_10 = arith.constant 0 : index
      %11 = vector.load %arg6[%c0_9, %c0_10] : memref<8x512xf32, #tpu.memory_space<vmem>>, vector<8x512xf32>
      %c0_11 = arith.constant 0 : index
      %c0_12 = arith.constant 0 : index
      %12 = vector.load %arg3[%c0_11, %c0_12] : memref<512x128xf32, #tpu.memory_space<vmem>>, vector<512x128xf32>
      %cst_13 = arith.constant dense<0.000000e+00> : vector<8x128xf32>
      %13 = tpu.matmul %11, %12, %cst_13 {dimension_numbers = #tpu.dot_dimension_numbers<[1], [0], [0], [1], [0, 0, 1, 1], [], []>} : vector<8x512xf32>, vector<512x128xf32>, vector<8x128xf32> -> vector<8x128xf32>
      %cst_14 = arith.constant 1.250000e-01 : f32
      %14 = vector.broadcast %cst_14 : f32 to vector<8x128xf32>
      %15 = arith.mulf %13, %14 : vector<8x128xf32>
      %c0_15 = arith.constant 0 : index
      %c0_16 = arith.constant 0 : index
      %16 = vector.load %arg4[%c0_15, %c0_16] : memref<1x128xf32, #tpu.memory_space<vmem>>, vector<1x128xf32>
      %17 = vector.broadcast %16 : vector<1x128xf32> to vector<8x128xf32>
      %18 = arith.addf %15, %17 : vector<8x128xf32>
      %19 = arith.mulf %18, %18 : vector<8x128xf32>
      %cst_17 = arith.constant dense<0.000000e+00> : vector<8xf32>
      %20 = vector.multi_reduction <add>, %19, %cst_17 [1] : vector<8x128xf32> to vector<8xf32>
      %21 = vector.shape_cast %20 : vector<8xf32> to vector<8x1xf32>
      %22 = math.rsqrt %21 : vector<8x1xf32>
      %23 = vector.broadcast %22 : vector<8x1xf32> to vector<8x128xf32>
      %24 = arith.mulf %18, %23 : vector<8x128xf32>
      %c0_18 = arith.constant 0 : index
      %c0_19 = arith.constant 0 : index
      %25 = vector.load %arg5[%c0_18, %c0_19] : memref<8x128xf32, #tpu.memory_space<vmem>>, vector<8x128xf32>
      tpu.vector_store %arg5[%c0_18, %c0_19], %24 {strides = array<i32>} : memref<8x128xf32, #tpu.memory_space<vmem>>, vector<8x128xf32>,
    } else {
    }
    return
  }
  func.func @transform_0(%arg0: i32, %arg1: i32) -> (i32, i32, i32) {
    %c0_i32 = arith.constant 0 : i32
    %c0_i32_0 = arith.constant 0 : i32
    return %arg0, %arg1, %c0_i32 : i32, i32, i32
  }
  func.func @transform_1(%arg0: i32, %arg1: i32) -> (i32, i32) {
    %c0_i32 = arith.constant 0 : i32
    %c0_i32_0 = arith.constant 0 : i32
    %c0_i32_1 = arith.constant 0 : i32
    return %c0_i32, %c0_i32_0 : i32, i32
  }
  func.func @transform_2(%arg0: i32, %arg1: i32) -> (i32, i32) {
    %c0_i32 = arith.constant 0 : i32
    %c0_i32_0 = arith.constant 0 : i32
    %c0_i32_1 = arith.constant 0 : i32
    return %c0_i32, %c0_i32_0 : i32, i32
  }
  func.func @transform_3(%arg0: i32, %arg1: i32) -> (i32, i32) {
    %c0_i32 = arith.constant 0 : i32
    %c0_i32_0 = arith.constant 0 : i32
    return %arg0, %c0_i32 : i32, i32
  }
}

</mosaic_0001>

<llo_original>
// kernel: tpu_custom_call.1
$region0: #{tpu_custom_call.1}
  #allocation0 [shape = 'u32[]', space=smem, size = 0x4, offset = 0x4, fixed_abs, tag = 'smem constant byte address 0x4 - core index']
  #allocation1 [shape = 'u32[144,128]{1,0:T(1,128)}', space=vmem, size = 0x12000, scoped, tag = 'internal scratch']
  #allocation2 [shape = 'f32[8,512]{1,0:T(8,128)}', space=vmem, size = 0x4000, scoped, tag = 'scratch operand']
  %s0 = inlined_call_operand.hbm [shape: f32[8,8,512], index: 0, kind: input, shape index: {}]
  %s1 = inlined_call_operand.hbm [shape: f32[512,128], index: 1, kind: input, shape index: {}]
  %s2 = inlined_call_operand.vmem [shape: f32[1,128], index: 2, kind: input, shape index: {}]
  %s3 = inlined_call_operand.hbm [shape: f32[8,128], index: 3, kind: output, shape index: {}]
  %s4 = sld [smem:[#allocation0]]
  $region38: #{tpu_custom_call.1} parent=0
    _
  %s6 = ssub.s32 1, %s4
  %s7 = scalar_select 0, %s6, %s4
  $region1: #{tpu_custom_call.1} parent=0
    #allocation3 [shape = 'u8[131072]{0}', space=vmem, size = 0x20000, scoped, tag = 'input window, operand 0, single buffered']
    #allocation4 [shape = 's32[1]{0}', space=sflag, size = 0x4, scoped, tag = 'scoped memory for tpu_custom_call.1']
    #allocation5 [shape = 's32[1]{0}', space=sflag, size = 0x4, scoped, tag = 'scoped memory for tpu_custom_call.1']
    #allocation6 [shape = 'u8[262144]{0}', space=vmem, size = 0x40000, scoped, tag = 'input window, operand 1, single buffered']
    #allocation7 [shape = 's32[1]{0}', space=sflag, size = 0x4, scoped, tag = 'scoped memory for tpu_custom_call.1']
    #allocation8 [shape = 'u8[4096]{0}', space=vmem, size = 0x1000, scoped, tag = 'output window, operand 0, single buffered']
    %8 = vsyncpa [#allocation4], 0
    %9 = vsyncpa [#allocation7], 0
    %10 = vsyncpa [#allocation5], 0
    // Predicated region
    $region2: #{tpu_custom_call.1} parent=1 // pred_check
      _
    $region3: #{tpu_custom_call.1} parent=1 // pred_check_branch
      %12 = sbr.rel (0) target = $region5
    $region4: #{tpu_custom_call.1} parent=1 // pred_region
      %s14 = ssub.s32 4096, 4096
      %15 = vsyncadd [#allocation4], %s14
      %s16 = sshll.u32 [#allocation3], 4
      %s17 = int_to_ptr.vmem [resolvable:$true] %s16
      %22 = dma.hbm_to_vmem [thread:$0]  %s0, 4096, %s17, [#allocation4], 512, 512, 32
    $region5: #{tpu_custom_call.1} parent=1 // pred_fallthru
      _
    // Predicated region
    $region6: #{tpu_custom_call.1} parent=1 // pred_check
      _
    $region7: #{tpu_custom_call.1} parent=1 // pred_check_branch
      %24 = sbr.rel (0) target = $region9
    $region8: #{tpu_custom_call.1} parent=1 // pred_region
      %s26 = ssub.s32 8192, 8192
      %27 = vsyncadd [#allocation7], %s26
      %s28 = sshll.u32 [#allocation6], 4
      %s29 = int_to_ptr.vmem [resolvable:$true] %s28
      %34 = dma.hbm_to_vmem [thread:$0]  %s1, 8192, %s29, [#allocation7], 128, 128, 8
    $region9: #{tpu_custom_call.1} parent=1 // pred_fallthru
      _
    // Predicated region
    $region10: #{tpu_custom_call.1} parent=1 // pred_check
      _
    $region11: #{tpu_custom_call.1} parent=1 // pred_check_branch
      %36 = sbr.rel (0) target = $region13
    $region12: #{tpu_custom_call.1} parent=1 // pred_region
      _
    $region13: #{tpu_custom_call.1} parent=1 // pred_fallthru
      _
    // Predicated region
    $region14: #{tpu_custom_call.1} parent=1 // pred_check
      _
    $region15: #{tpu_custom_call.1} parent=1 // pred_check_branch
      %38 = sbr.rel (0) target = $region17
    $region16: #{tpu_custom_call.1} parent=1 // pred_region
      %39 = dma.done [#allocation4], 4096
    $region17: #{tpu_custom_call.1} parent=1 // pred_fallthru
      _
    // Predicated region
    $region18: #{tpu_custom_call.1} parent=1 // pred_check
      _
    $region19: #{tpu_custom_call.1} parent=1 // pred_check_branch
      %41 = sbr.rel (0) target = $region21
    $region20: #{tpu_custom_call.1} parent=1 // pred_region
      %42 = dma.done [#allocation7], 8192
    $region21: #{tpu_custom_call.1} parent=1 // pred_fallthru
      _
    %p43 = scmp.eq.s32.totalorder 0, 0
    // Predicated region
    $region22: #{tpu_custom_call.1} parent=1 // pred_check
      %p44 = pneg %p43
    $region23: #{tpu_custom_call.1} parent=1 // pred_check_branch
      %46 = sbr.rel (%p44) target = $region25
    $region24: #{tpu_custom_call.1} parent=1 // pred_region
      %47 = vst [vmem:[#allocation2] sm:$0xff] 0.0
      %48 = vst [vmem:[#allocation2 + $0x8] sm:$0xff] 0.0
      %49 = vst [vmem:[#allocation2 + $0x10] sm:$0xff] 0.0
      %50 = vst [vmem:[#allocation2 + $0x18] sm:$0xff] 0.0
    $region25: #{tpu_custom_call.1} parent=1 // pred_fallthru
      _
    %v51 = vld [vmem:[#allocation3] sm:$0xff]
    %v52 = vld [vmem:[#allocation3 + $0x8] sm:$0xff]
    %v53 = vld [vmem:[#allocation3 + $0x10] sm:$0xff]
    %v54 = vld [vmem:[#allocation3 + $0x18] sm:$0xff]
    %v55 = vld [vmem:[#allocation3 + $0x20] sm:$0xff]
    %v56 = vld [vmem:[#allocation3 + $0x28] sm:$0xff]
    %v57 = vld [vmem:[#allocation3 + $0x30] sm:$0xff]
    %v58 = vld [vmem:[#allocation3 + $0x38] sm:$0xff]
    %v59 = vld [vmem:[#allocation3 + $0x40] sm:$0xff]
    %v60 = vld [vmem:[#allocation3 + $0x48] sm:$0xff]
    %v61 = vld [vmem:[#allocation3 + $0x50] sm:$0xff]
    %v62 = vld [vmem:[#allocation3 + $0x58] sm:$0xff]
    %v63 = vld [vmem:[#allocation3 + $0x60] sm:$0xff]
    %v64 = vld [vmem:[#allocation3 + $0x68] sm:$0xff]
    %v65 = vld [vmem:[#allocation3 + $0x70] sm:$0xff]
    %v66 = vld [vmem:[#allocation3 + $0x78] sm:$0xff]
    %v67 = vld [vmem:[#allocation3 + $0x80] sm:$0xff]
    %v68 = vld [vmem:[#allocation3 + $0x88] sm:$0xff]
    %v69 = vld [vmem:[#allocation3 + $0x90] sm:$0xff]
    %v70 = vld [vmem:[#allocation3 + $0x98] sm:$0xff]
    %v71 = vld [vmem:[#allocation3 + $0xa0] sm:$0xff]
    %v72 = vld [vmem:[#allocation3 + $0xa8] sm:$0xff]
    %v73 = vld [vmem:[#allocation3 + $0xb0] sm:$0xff]
    %v74 = vld [vmem:[#allocation3 + $0xb8] sm:$0xff]
    %v75 = vld [vmem:[#allocation3 + $0xc0] sm:$0xff]
    %v76 = vld [vmem:[#allocation3 + $0xc8] sm:$0xff]
    %v77 = vld [vmem:[#allocation3 + $0xd0] sm:$0xff]
    %v78 = vld [vmem:[#allocation3 + $0xd8] sm:$0xff]
    %v79 = vld [vmem:[#allocation3 + $0xe0] sm:$0xff]
    %v80 = vld [vmem:[#allocation3 + $0xe8] sm:$0xff]
    %v81 = vld [vmem:[#allocation3 + $0xf0] sm:$0xff]
    %v82 = vld [vmem:[#allocation3 + $0xf8] sm:$0xff]
    %v83 = vld [vmem:[#allocation2] sm:$0xff]
    %v84 = vld [vmem:[#allocation2 + $0x8] sm:$0xff]
    %v85 = vld [vmem:[#allocation2 + $0x10] sm:$0xff]
    %v86 = vld [vmem:[#allocation2 + $0x18] sm:$0xff]
    %v87 = vrot.slane %v51, 4
    %v88 = vadd.f32 %v51, %v87
    %v89 = vrot.slane %v88, 2
    %v90 = vadd.f32 %v88, %v89
    %v91 = vrot.slane %v90, 1
    %v92 = vadd.f32 %v90, %v91
    %v93 = vrot.slane %v52, 4
    %v94 = vadd.f32 %v52, %v93
    %v95 = vrot.slane %v94, 2
    %v96 = vadd.f32 %v94, %v95
    %v97 = vrot.slane %v96, 1
    %v98 = vadd.f32 %v96, %v97
    %v99 = vrot.slane %v53, 4
    %v100 = vadd.f32 %v53, %v99
    %v101 = vrot.slane %v100, 2
    %v102 = vadd.f32 %v100, %v101
    %v103 = vrot.slane %v102, 1
    %v104 = vadd.f32 %v102, %v103
    %v105 = vrot.slane %v54, 4
    %v106 = vadd.f32 %v54, %v105
    %v107 = vrot.slane %v106, 2
    %v108 = vadd.f32 %v106, %v107
    %v109 = vrot.slane %v108, 1
    %v110 = vadd.f32 %v108, %v109
    %v111 = vrot.slane %v55, 4
    %v112 = vadd.f32 %v55, %v111
    %v113 = vrot.slane %v112, 2
    %v114 = vadd.f32 %v112, %v113
    %v115 = vrot.slane %v114, 1
    %v116 = vadd.f32 %v114, %v115
    %v117 = vrot.slane %v56, 4
    %v118 = vadd.f32 %v56, %v117
    %v119 = vrot.slane %v118, 2
    %v120 = vadd.f32 %v118, %v119
    %v121 = vrot.slane %v120, 1
    %v122 = vadd.f32 %v120, %v121
    %v123 = vrot.slane %v57, 4
    %v124 = vadd.f32 %v57, %v123
    %v125 = vrot.slane %v124, 2
    %v126 = vadd.f32 %v124, %v125
    %v127 = vrot.slane %v126, 1
    %v128 = vadd.f32 %v126, %v127
    %v129 = vrot.slane %v58, 4
    %v130 = vadd.f32 %v58, %v129
    %v131 = vrot.slane %v130, 2
    %v132 = vadd.f32 %v130, %v131
    %v133 = vrot.slane %v132, 1
    %v134 = vadd.f32 %v132, %v133
    %v135 = vrot.slane %v59, 4
    %v136 = vadd.f32 %v59, %v135
    %v137 = vrot.slane %v136, 2
    %v138 = vadd.f32 %v136, %v137
    %v139 = vrot.slane %v138, 1
    %v140 = vadd.f32 %v138, %v139
    %v141 = vrot.slane %v60, 4
    %v142 = vadd.f32 %v60, %v141
    %v143 = vrot.slane %v142, 2
    %v144 = vadd.f32 %v142, %v143
    %v145 = vrot.slane %v144, 1
    %v146 = vadd.f32 %v144, %v145
    %v147 = vrot.slane %v61, 4
    %v148 = vadd.f32 %v61, %v147
    %v149 = vrot.slane %v148, 2
    %v150 = vadd.f32 %v148, %v149
    %v151 = vrot.slane %v150, 1
    %v152 = vadd.f32 %v150, %v151
    %v153 = vrot.slane %v62, 4
    %v154 = vadd.f32 %v62, %v153
    %v155 = vrot.slane %v154, 2
    %v156 = vadd.f32 %v154, %v155
    %v157 = vrot.slane %v156, 1
    %v158 = vadd.f32 %v156, %v157
    %v159 = vrot.slane %v63, 4
    %v160 = vadd.f32 %v63, %v159
    %v161 = vrot.slane %v160, 2
    %v162 = vadd.f32 %v160, %v161
    %v163 = vrot.slane %v162, 1
    %v164 = vadd.f32 %v162, %v163
    %v165 = vrot.slane %v64, 4
    %v166 = vadd.f32 %v64, %v165
    %v167 = vrot.slane %v166, 2
    %v168 = vadd.f32 %v166, %v167
    %v169 = vrot.slane %v168, 1
    %v170 = vadd.f32 %v168, %v169
    %v171 = vrot.slane %v65, 4
    %v172 = vadd.f32 %v65, %v171
    %v173 = vrot.slane %v172, 2
    %v174 = vadd.f32 %v172, %v173
    %v175 = vrot.slane %v174, 1
    %v176 = vadd.f32 %v174, %v175
    %v177 = vrot.slane %v66, 4
    %v178 = vadd.f32 %v66, %v177
    %v179 = vrot.slane %v178, 2
    %v180 = vadd.f32 %v178, %v179
    %v181 = vrot.slane %v180, 1
    %v182 = vadd.f32 %v180, %v181
    %v183 = vrot.slane %v67, 4
    %v184 = vadd.f32 %v67, %v183
    %v185 = vrot.slane %v184, 2
    %v186 = vadd.f32 %v184, %v185
    %v187 = vrot.slane %v186, 1
    %v188 = vadd.f32 %v186, %v187
    %v189 = vrot.slane %v68, 4
    %v190 = vadd.f32 %v68, %v189
    %v191 = vrot.slane %v190, 2
    %v192 = vadd.f32 %v190, %v191
    %v193 = vrot.slane %v192, 1
    %v194 = vadd.f32 %v192, %v193
    %v195 = vrot.slane %v69, 4
    %v196 = vadd.f32 %v69, %v195
    %v197 = vrot.slane %v196, 2
    %v198 = vadd.f32 %v196, %v197
    %v199 = vrot.slane %v198, 1
    %v200 = vadd.f32 %v198, %v199
    %v201 = vrot.slane %v70, 4
    %v202 = vadd.f32 %v70, %v201
    %v203 = vrot.slane %v202, 2
    %v204 = vadd.f32 %v202, %v203
    %v205 = vrot.slane %v204, 1
    %v206 = vadd.f32 %v204, %v205
    %v207 = vrot.slane %v71, 4
    %v208 = vadd.f32 %v71, %v207
    %v209 = vrot.slane %v208, 2
    %v210 = vadd.f32 %v208, %v209
    %v211 = vrot.slane %v210, 1
    %v212 = vadd.f32 %v210, %v211
    %v213 = vrot.slane %v72, 4
    %v214 = vadd.f32 %v72, %v213
    %v215 = vrot.slane %v214, 2
    %v216 = vadd.f32 %v214, %v215
    %v217 = vrot.slane %v216, 1
    %v218 = vadd.f32 %v216, %v217
    %v219 = vrot.slane %v73, 4
    %v220 = vadd.f32 %v73, %v219
    %v221 = vrot.slane %v220, 2
    %v222 = vadd.f32 %v220, %v221
    %v223 = vrot.slane %v222, 1
    %v224 = vadd.f32 %v222, %v223
    %v225 = vrot.slane %v74, 4
    %v226 = vadd.f32 %v74, %v225
    %v227 = vrot.slane %v226, 2
    %v228 = vadd.f32 %v226, %v227
    %v229 = vrot.slane %v228, 1
    %v230 = vadd.f32 %v228, %v229
    %v231 = vrot.slane %v75, 4
    %v232 = vadd.f32 %v75, %v231
    %v233 = vrot.slane %v232, 2
    %v234 = vadd.f32 %v232, %v233
    %v235 = vrot.slane %v234, 1
    %v236 = vadd.f32 %v234, %v235
    %v237 = vrot.slane %v76, 4
    %v238 = vadd.f32 %v76, %v237
    %v239 = vrot.slane %v238, 2
    %v240 = vadd.f32 %v238, %v239
    %v241 = vrot.slane %v240, 1
    %v242 = vadd.f32 %v240, %v241
    %v243 = vrot.slane %v77, 4
    %v244 = vadd.f32 %v77, %v243
    %v245 = vrot.slane %v244, 2
    %v246 = vadd.f32 %v244, %v245
    %v247 = vrot.slane %v246, 1
    %v248 = vadd.f32 %v246, %v247
    %v249 = vrot.slane %v78, 4
    %v250 = vadd.f32 %v78, %v249
    %v251 = vrot.slane %v250, 2
    %v252 = vadd.f32 %v250, %v251
    %v253 = vrot.slane %v252, 1
    %v254 = vadd.f32 %v252, %v253
    %v255 = vrot.slane %v79, 4
    %v256 = vadd.f32 %v79, %v255
    %v257 = vrot.slane %v256, 2
    %v258 = vadd.f32 %v256, %v257
    %v259 = vrot.slane %v258, 1
    %v260 = vadd.f32 %v258, %v259
    %v261 = vrot.slane %v80, 4
    %v262 = vadd.f32 %v80, %v261
    %v263 = vrot.slane %v262, 2
    %v264 = vadd.f32 %v262, %v263
    %v265 = vrot.slane %v264, 1
    %v266 = vadd.f32 %v264, %v265
    %v267 = vrot.slane %v81, 4
    %v268 = vadd.f32 %v81, %v267
    %v269 = vrot.slane %v268, 2
    %v270 = vadd.f32 %v268, %v269
    %v271 = vrot.slane %v270, 1
    %v272 = vadd.f32 %v270, %v271
    %v273 = vrot.slane %v82, 4
    %v274 = vadd.f32 %v82, %v273
    %v275 = vrot.slane %v274, 2
    %v276 = vadd.f32 %v274, %v275
    %v277 = vrot.slane %v276, 1
    %v278 = vadd.f32 %v276, %v277
    %vm311 = vcmask 1041409
    %v312 = vsel %vm311, %v116, %v92
    %vm313 = vcmask 1042434
    %v314 = vsel %vm313, %v140, %v312
    %vm315 = vcmask 1043459
    %v316 = vsel %vm315, %v164, %v314
    %vm317 = vcmask 1044484
    %v318 = vsel %vm317, %v188, %v316
    %vm319 = vcmask 1045509
    %v320 = vsel %vm319, %v212, %v318
    %vm321 = vcmask 1046534
    %v322 = vsel %vm321, %v236, %v320
    %vm323 = vcmask 1047559
    %v324 = vsel %vm323, %v260, %v322
    %v325 = vsel %vm311, %v122, %v98
    %v326 = vsel %vm313, %v146, %v325
    %v327 = vsel %vm315, %v170, %v326
    %v328 = vsel %vm317, %v194, %v327
    %v329 = vsel %vm319, %v218, %v328
    %v330 = vsel %vm321, %v242, %v329
    %v331 = vsel %vm323, %v266, %v330
    %v332 = vsel %vm311, %v128, %v104
    %v333 = vsel %vm313, %v152, %v332
    %v334 = vsel %vm315, %v176, %v333
    %v335 = vsel %vm317, %v200, %v334
    %v336 = vsel %vm319, %v224, %v335
    %v337 = vsel %vm321, %v248, %v336
    %v338 = vsel %vm323, %v272, %v337
    %v339 = vsel %vm311, %v134, %v110
    %v340 = vsel %vm313, %v158, %v339
    %v341 = vsel %vm315, %v182, %v340
    %v342 = vsel %vm317, %v206, %v341
    %v343 = vsel %vm319, %v230, %v342
    %v344 = vsel %vm321, %v254, %v343
    %v345 = vsel %vm323, %v278, %v344
    %v350 = vadd.f32 %v83, %v324
    %v351 = vadd.f32 %v84, %v331
    %v352 = vadd.f32 %v85, %v338
    %v353 = vadd.f32 %v86, %v345
    %354 = vst [vmem:[#allocation2] sm:$0xff] %v350
    %355 = vst [vmem:[#allocation2 + $0x8] sm:$0xff] %v351
    %356 = vst [vmem:[#allocation2 + $0x10] sm:$0xff] %v352
    %357 = vst [vmem:[#allocation2 + $0x18] sm:$0xff] %v353
    // Predicated region
    $region26: #{tpu_custom_call.1} parent=1 // pred_check
      %p358 = pneg %p43
    $region27: #{tpu_custom_call.1} parent=1 // pred_check_branch
      %360 = sbr.rel (%p358) target = $region29
    $region28: #{tpu_custom_call.1} parent=1 // pred_region
      %v361 = vld [vmem:[#allocation2] sm:$0xff]
      %v362 = vld [vmem:[#allocation2 + $0x8] sm:$0xff]
      %v363 = vld [vmem:[#allocation2 + $0x10] sm:$0xff]
      %v364 = vld [vmem:[#allocation2 + $0x18] sm:$0xff]
      %v365 = vld [vmem:[#allocation6] sm:$0xff]
      %v366 = vld [vmem:[#allocation6 + $0x8] sm:$0xff]
      %v367 = vld [vmem:[#allocation6 + $0x10] sm:$0xff]
      %v368 = vld [vmem:[#allocation6 + $0x18] sm:$0xff]
      %v369 = vld [vmem:[#allocation6 + $0x20] sm:$0xff]
      %v370 = vld [vmem:[#allocation6 + $0x28] sm:$0xff]
      %v371 = vld [vmem:[#allocation6 + $0x30] sm:$0xff]
      %v372 = vld [vmem:[#allocation6 + $0x38] sm:$0xff]
      %v373 = vld [vmem:[#allocation6 + $0x40] sm:$0xff]
      %v374 = vld [vmem:[#allocation6 + $0x48] sm:$0xff]
      %v375 = vld [vmem:[#allocation6 + $0x50] sm:$0xff]
      %v376 = vld [vmem:[#allocation6 + $0x58] sm:$0xff]
      %v377 = vld [vmem:[#allocation6 + $0x60] sm:$0xff]
      %v378 = vld [vmem:[#allocation6 + $0x68] sm:$0xff]
      %v379 = vld [vmem:[#allocation6 + $0x70] sm:$0xff]
      %v380 = vld [vmem:[#allocation6 + $0x78] sm:$0xff]
      %v381 = vld [vmem:[#allocation6 + $0x80] sm:$0xff]
      %v382 = vld [vmem:[#allocation6 + $0x88] sm:$0xff]
      %v383 = vld [vmem:[#allocation6 + $0x90] sm:$0xff]
      %v384 = vld [vmem:[#allocation6 + $0x98] sm:$0xff]
      %v385 = vld [vmem:[#allocation6 + $0xa0] sm:$0xff]
      %v386 = vld [vmem:[#allocation6 + $0xa8] sm:$0xff]
      %v387 = vld [vmem:[#allocation6 + $0xb0] sm:$0xff]
      %v388 = vld [vmem:[#allocation6 + $0xb8] sm:$0xff]
      %v389 = vld [vmem:[#allocation6 + $0xc0] sm:$0xff]
      %v390 = vld [vmem:[#allocation6 + $0xc8] sm:$0xff]
      %v391 = vld [vmem:[#allocation6 + $0xd0] sm:$0xff]
      %v392 = vld [vmem:[#allocation6 + $0xd8] sm:$0xff]
      %v393 = vld [vmem:[#allocation6 + $0xe0] sm:$0xff]
      %v394 = vld [vmem:[#allocation6 + $0xe8] sm:$0xff]
      %v395 = vld [vmem:[#allocation6 + $0xf0] sm:$0xff]
      %v396 = vld [vmem:[#allocation6 + $0xf8] sm:$0xff]
      %v397 = vld [vmem:[#allocation6 + $0x100] sm:$0xff]
      %v398 = vld [vmem:[#allocation6 + $0x108] sm:$0xff]
      %v399 = vld [vmem:[#allocation6 + $0x110] sm:$0xff]
      %v400 = vld [vmem:[#allocation6 + $0x118] sm:$0xff]
      %v401 = vld [vmem:[#allocation6 + $0x120] sm:$0xff]
      %v402 = vld [vmem:[#allocation6 + $0x128] sm:$0xff]
      %v403 = vld [vmem:[#allocation6 + $0x130] sm:$0xff]
      %v404 = vld [vmem:[#allocation6 + $0x138] sm:$0xff]
      %v405 = vld [vmem:[#allocation6 + $0x140] sm:$0xff]
      %v406 = vld [vmem:[#allocation6 + $0x148] sm:$0xff]
      %v407 = vld [vmem:[#allocation6 + $0x150] sm:$0xff]
      %v408 = vld [vmem:[#allocation6 + $0x158] sm:$0xff]
      %v409 = vld [vmem:[#allocation6 + $0x160] sm:$0xff]
      %v410 = vld [vmem:[#allocation6 + $0x168] sm:$0xff]
      %v411 = vld [vmem:[#allocation6 + $0x170] sm:$0xff]
      %v412 = vld [vmem:[#allocation6 + $0x178] sm:$0xff]
      %v413 = vld [vmem:[#allocation6 + $0x180] sm:$0xff]
      %v414 = vld [vmem:[#allocation6 + $0x188] sm:$0xff]
      %v415 = vld [vmem:[#allocation6 + $0x190] sm:$0xff]
      %v416 = vld [vmem:[#allocation6 + $0x198] sm:$0xff]
      %v417 = vld [vmem:[#allocation6 + $0x1a0] sm:$0xff]
      %v418 = vld [vmem:[#allocation6 + $0x1a8] sm:$0xff]
      %v419 = vld [vmem:[#allocation6 + $0x1b0] sm:$0xff]
      %v420 = vld [vmem:[#allocation6 + $0x1b8] sm:$0xff]
      %v421 = vld [vmem:[#allocation6 + $0x1c0] sm:$0xff]
      %v422 = vld [vmem:[#allocation6 + $0x1c8] sm:$0xff]
      %v423 = vld [vmem:[#allocation6 + $0x1d0] sm:$0xff]
      %v424 = vld [vmem:[#allocation6 + $0x1d8] sm:$0xff]
      %v425 = vld [vmem:[#allocation6 + $0x1e0] sm:$0xff]
      %v426 = vld [vmem:[#allocation6 + $0x1e8] sm:$0xff]
      %v427 = vld [vmem:[#allocation6 + $0x1f0] sm:$0xff]
      %v428 = vld [vmem:[#allocation6 + $0x1f8] sm:$0xff]
      %429 = vmatprep.subr.mxu0 0.0
      %430 = vmatpush1.msra.mxu0 %v365
      %431 = vmatprep.subr.mxu0 0.0
      %432 = vmatpush1.msra.mxu0 %v366
      %433 = vmatprep.subr.mxu0 0.0
      %434 = vmatpush1.msra.mxu0 %v367
      %435 = vmatprep.subr.mxu0 0.0
      %436 = vmatpush1.msra.mxu0 %v368
      %437 = vmatprep.subr.mxu0 0.0
      %438 = vmatpush1.msra.mxu0 %v369
      %439 = vmatprep.subr.mxu0 0.0
      %440 = vmatpush1.msra.mxu0 %v370
      %441 = vmatprep.subr.mxu0 0.0
      %442 = vmatpush1.msra.mxu0 %v371
      %443 = vmatprep.subr.mxu0 0.0
      %444 = vmatpush1.msra.mxu0 %v372
      %445 = vmatprep.subr.mxu0 0.0
      %446 = vmatpush1.msra.mxu0 %v373
      %447 = vmatprep.subr.mxu0 0.0
      %448 = vmatpush1.msra.mxu0 %v374
      %449 = vmatprep.subr.mxu0 0.0
      %450 = vmatpush1.msra.mxu0 %v375
      %451 = vmatprep.subr.mxu0 0.0
      %452 = vmatpush1.msra.mxu0 %v376
      %453 = vmatprep.subr.mxu0 0.0
      %454 = vmatpush1.msra.mxu0 %v377
      %455 = vmatprep.subr.mxu0 0.0
      %456 = vmatpush1.msra.mxu0 %v378
      %457 = vmatprep.subr.mxu0 0.0
      %458 = vmatpush1.msra.mxu0 %v379
      %459 = vmatprep.subr.mxu0 0.0
      %460 = vmatpush1.msra.mxu0 %v380
      %461 = vmatprep.subr.mxu0 0.0
      %462 = vmatpush1.msra.mxu0 %v381
      %463 = vmatprep.subr.mxu0 0.0
      %464 = vmatpush1.msra.mxu0 %v382
      %465 = vmatprep.subr.mxu0 0.0
      %466 = vmatpush1.msra.mxu0 %v383
      %467 = vmatprep.subr.mxu0 0.0
      %468 = vmatpush1.msra.mxu0 %v384
      %469 = vmatprep.subr.mxu0 0.0
      %470 = vmatpush1.msra.mxu0 %v385
      %471 = vmatprep.subr.mxu0 0.0
      %472 = vmatpush1.msra.mxu0 %v386
      %473 = vmatprep.subr.mxu0 0.0
      %474 = vmatpush1.msra.mxu0 %v387
      %475 = vmatprep.subr.mxu0 0.0
      %476 = vmatpush1.msra.mxu0 %v388
      %477 = vmatprep.subr.mxu0 0.0
      %478 = vmatpush1.msra.mxu0 %v389
      %479 = vmatprep.subr.mxu0 0.0
      %480 = vmatpush1.msra.mxu0 %v390
      %481 = vmatprep.subr.mxu0 0.0
      %482 = vmatpush1.msra.mxu0 %v391
      %483 = vmatprep.subr.mxu0 0.0
      %484 = vmatpush1.msra.mxu0 %v392
      %485 = vmatprep.subr.mxu0 0.0
      %486 = vmatpush1.msra.mxu0 %v393
      %487 = vmatprep.subr.mxu0 0.0
      %488 = vmatpush1.msra.mxu0 %v394
      %489 = vmatprep.subr.mxu0 0.0
      %490 = vmatpush1.msra.mxu0 %v395
      %491 = vmatprep.subr.mxu0 0.0
      %492 = vmatpush1.msra.mxu0 %v396
      %493 = vmatprep.mubr.f32.mxu0 %v362
      %494 = vmatmul.mubr.f32.gmra.mrb[0].mxu0 %v361
      %v495 = vpop.f32.mrb[0].mxu0
      %v496 = vadd.f32 0.0, %v495
      %v497 = vpop.f32.mrb[0].mxu0
      %498 = vdwg.mxu0
      %499 = vmatprep.subr.mxu0 0.0
      %500 = vmatpush1.msra.mxu0 %v397
      %501 = vmatprep.subr.mxu0 0.0
      %502 = vmatpush1.msra.mxu0 %v398
      %503 = vmatprep.subr.mxu0 0.0
      %504 = vmatpush1.msra.mxu0 %v399
      %505 = vmatprep.subr.mxu0 0.0
      %506 = vmatpush1.msra.mxu0 %v400
      %507 = vmatprep.subr.mxu0 0.0
      %508 = vmatpush1.msra.mxu0 %v401
      %509 = vmatprep.subr.mxu0 0.0
      %510 = vmatpush1.msra.mxu0 %v402
      %511 = vmatprep.subr.mxu0 0.0
      %512 = vmatpush1.msra.mxu0 %v403
      %513 = vmatprep.subr.mxu0 0.0
      %514 = vmatpush1.msra.mxu0 %v404
      %515 = vmatprep.subr.mxu0 0.0
      %516 = vmatpush1.msra.mxu0 %v405
      %517 = vmatprep.subr.mxu0 0.0
      %518 = vmatpush1.msra.mxu0 %v406
      %519 = vmatprep.subr.mxu0 0.0
      %520 = vmatpush1.msra.mxu0 %v407
      %521 = vmatprep.subr.mxu0 0.0
      %522 = vmatpush1.msra.mxu0 %v408
      %523 = vmatprep.subr.mxu0 0.0
      %524 = vmatpush1.msra.mxu0 %v409
      %525 = vmatprep.subr.mxu0 0.0
      %526 = vmatpush1.msra.mxu0 %v410
      %527 = vmatprep.subr.mxu0 0.0
      %528 = vmatpush1.msra.mxu0 %v411
      %529 = vmatprep.subr.mxu0 0.0
      %530 = vmatpush1.msra.mxu0 %v412
      %531 = vmatprep.subr.mxu0 0.0
      %532 = vmatpush1.msra.mxu0 %v413
      %533 = vmatprep.subr.mxu0 0.0
      %534 = vmatpush1.msra.mxu0 %v414
      %535 = vmatprep.subr.mxu0 0.0
      %536 = vmatpush1.msra.mxu0 %v415
      %537 = vmatprep.subr.mxu0 0.0
      %538 = vmatpush1.msra.mxu0 %v416
      %539 = vmatprep.subr.mxu0 0.0
      %540 = vmatpush1.msra.mxu0 %v417
      %541 = vmatprep.subr.mxu0 0.0
      %542 = vmatpush1.msra.mxu0 %v418
      %543 = vmatprep.subr.mxu0 0.0
      %544 = vmatpush1.msra.mxu0 %v419
      %545 = vmatprep.subr.mxu0 0.0
      %546 = vmatpush1.msra.mxu0 %v420
      %547 = vmatprep.subr.mxu0 0.0
      %548 = vmatpush1.msra.mxu0 %v421
      %549 = vmatprep.subr.mxu0 0.0
      %550 = vmatpush1.msra.mxu0 %v422
      %551 = vmatprep.subr.mxu0 0.0
      %552 = vmatpush1.msra.mxu0 %v423
      %553 = vmatprep.subr.mxu0 0.0
      %554 = vmatpush1.msra.mxu0 %v424
      %555 = vmatprep.subr.mxu0 0.0
      %556 = vmatpush1.msra.mxu0 %v425
      %557 = vmatprep.subr.mxu0 0.0
      %558 = vmatpush1.msra.mxu0 %v426
      %559 = vmatprep.subr.mxu0 0.0
      %560 = vmatpush1.msra.mxu0 %v427
      %561 = vmatprep.subr.mxu0 0.0
      %562 = vmatpush1.msra.mxu0 %v428
      %563 = vmatprep.mubr.f32.mxu0 %v364
      %564 = vmatmul.mubr.f32.gmra.mrb[0].mxu0 %v363
      %v565 = vpop.f32.mrb[0].mxu0
      %v566 = vadd.f32 %v496, %v565
      %v567 = vpop.f32.mrb[0].mxu0
      %568 = vdwg.mxu0
      %v569 = vmul.f32 %v566, 0.125
      %v570 = vld [vmem:[%s2] sm:$0x1]
      %v572 = vlaneseq
      %v573 = vshrl.u32 %v572, 7
      %v574 = vsub.s32 0, %v573
      %v575 = vrot.slane %v570, %v574
      %v577 = vadd.f32 %v569, %v575
      %v578 = vmul.f32 %v577, %v577
      %579 = vadd.xlane.f32.xlu0 %v578
      %v580 = vpop.xlane.xlu0 %579
      %v581 = vrsqrt.pop %v580
      %v582 = vmul.f32 %v577, %v581
      %583 = vst [vmem:[#allocation8] sm:$0xff] %v582
    $region29: #{tpu_custom_call.1} parent=1 // pred_fallthru
      _
    // Predicated region
    $region30: #{tpu_custom_call.1} parent=1 // pred_check
      _
    $region31: #{tpu_custom_call.1} parent=1 // pred_check_branch
      %585 = sbr.rel (0) target = $region33
    $region32: #{tpu_custom_call.1} parent=1 // pred_region
      %s587 = ssub.s32 128, 128
      %588 = vsyncadd [#allocation5], %s587
      %s590 = sshll.u32 [#allocation8], 4
      %s591 = int_to_ptr.vmem [resolvable:$true] %s590
      %593 = dma.vmem_to_hbm [thread:$0]  %s591, 128, %s3, [#allocation5]
    $region33: #{tpu_custom_call.1} parent=1 // pred_fallthru
      _
    // Predicated region
    $region34: #{tpu_custom_call.1} parent=1 // pred_check
      _
    $region35: #{tpu_custom_call.1} parent=1 // pred_check_branch
      %595 = sbr.rel (0) target = $region37
    $region36: #{tpu_custom_call.1} parent=1 // pred_region
      %596 = dma.done [#allocation5], 128
    $region37: #{tpu_custom_call.1} parent=1 // pred_fallthru
      _
    %597 = vsyncpa [#allocation4], 1
    %598 = vsyncpa [#allocation7], 1
    %599 = vsyncpa [#allocation5], 1

</llo_original>
